<compile_context>
chip_gen: v6e
topology: v6e:2x2x1
jax: 0.10.0
libtpu: 0.0.40
codegen_flags: <defaults>
</compile_context>

<pallas_src>
import jax
import jax.numpy as jnp
from jax import lax
from jax.experimental import pallas as pl
from jax.experimental.pallas import tpu as pltpu

EPS = 1e-3
_VMEM_LIMIT = 48 << 20          # <= 64 MiB physical on v7x, plenty on v5e/v6e
_STATS_BLOCK_BYTES = 16 << 20   # read-only pass: 2 x 16 MiB in-flight
_APPLY_BLOCK_BYTES = 8 << 20    # read+write pass: 2 x 8 (in) + 2 x 8 (out)
_FUSED_VMEM_BUDGET = 40 << 20   # conservative budget for the single-pass path


def _round_up(x, m):
    return (x + m - 1) // m * m


def _sublane_pad(c, itemsize):
    # sublane tile: 8 rows of 32-bit -> 8 (f32), 16 (bf16), 32 (int8/fp8)
    return _round_up(c, 8 * 4 // itemsize)


def _pick_hw_tile(hw, c_pad, itemsize, target_bytes):
    """Lane-multiple spatial tile whose (c_pad, t) block fits target_bytes."""
    bytes_per_lane = c_pad * itemsize
    max_lanes = max(128, (target_bytes // bytes_per_lane) // 128 * 128)
    if hw % 128 == 0:
        # prefer an exact divisor: no tail handling needed anywhere
        for t in range(min(hw, max_lanes), 0, -128):
            if hw % t == 0:
                return t
        return 128
    if hw <= max_lanes:
        return hw          # single full-extent block (block dim == array dim)
    return max_lanes       # tail tile: masked in stats, OOB stores discarded


# --------------------------- fused single-pass path -------------------------

def _fused_kernel(x_ref, gba_ref, o_ref):
    x = x_ref[...].astype(jnp.float32)                       # (N, C, HW)
    n_blk, _, hw_blk = x.shape
    inv_cnt = 1.0 / float(n_blk * hw_blk)
    mean = jnp.sum(jnp.sum(x, axis=2, keepdims=True),
                   axis=0, keepdims=True) * inv_cnt          # (1, C, 1)
    d = x - mean
    var = jnp.sum(jnp.sum(d * d, axis=2, keepdims=True),
                  axis=0, keepdims=True) * inv_cnt           # (1, C, 1)
    inv_std = lax.rsqrt(var + EPS)
    scale = gba_ref[0] * inv_std                              # (1, C, 1)
    bias = gba_ref[1] - mean * scale
    alpha = gba_ref[2]                                        # (C, 1)
    y = x * scale + bias
    o_ref[...] = jnp.where(y >= 0.0, y, alpha * y).astype(o_ref.dtype)


# --------------------------- two-pass streaming path ------------------------

def _make_stats_kernel(t_hw, hw, needs_mask):
    def kernel(x_ref, sum_ref, sumsq_ref):
        # Per-batch partial accumulator: init on the first hw-tile of *this*
        # batch (correct even when the batch axis is sharded across cores).
        @pl.when(pl.program_id(1) == 0)
        def _init():
            sum_ref[...] = jnp.zeros_like(sum_ref)
            sumsq_ref[...] = jnp.zeros_like(sumsq_ref)

        x = x_ref[0].astype(jnp.float32)                      # (C, t_hw)
        if needs_mask:
            j = pl.program_id(1)
            lane = lax.broadcasted_iota(jnp.int32, x.shape, 1)
            x = jnp.where(j * t_hw + lane < hw, x, 0.0)
        sum_ref[...] += jnp.sum(x, axis=-1, keepdims=True)     # (C,1) -> (1,C,1)
        sumsq_ref[...] += jnp.sum(x * x, axis=-1, keepdims=True)
    return kernel


def _make_apply_kernel(inv_cnt):
    def kernel(x_ref, sum_ref, sumsq_ref, gba_ref, o_ref):
        # C-length BN fold done in-kernel (negligible vs. the 8 MiB DMA).
        s = jnp.sum(sum_ref[...], axis=0)                     # (C, 1)
        ss = jnp.sum(sumsq_ref[...], axis=0)                  # (C, 1)
        mean = s * inv_cnt
        var = jnp.maximum(ss * inv_cnt - mean * mean, 0.0)    # biased variance
        inv_std = lax.rsqrt(var + EPS)
        scale = gba_ref[0] * inv_std                          # (C, 1)
        bias = gba_ref[1] - mean * scale
        alpha = gba_ref[2]

        x = x_ref[...].astype(jnp.float32)                    # (1, C, t_hw)
        y = x * scale + bias
        o_ref[...] = jnp.where(y >= 0.0, y, alpha * y).astype(o_ref.dtype)
    return kernel


# --------------------------------- wrapper ----------------------------------

def bnprelu(x_nchw, gamma, beta, alpha, *, force_two_pass=False,
            stats_block_bytes=_STATS_BLOCK_BYTES,
            apply_block_bytes=_APPLY_BLOCK_BYTES):
    """Training-mode BatchNorm2d(eps=1e-3) + per-channel PReLU forward.

    x_nchw: (N, C, H, W). gamma/beta/alpha: (C,). Returns NCHW output.
    """
    n, c, h, w = x_nchw.shape
    hw = h * w
    x3 = x_nchw.reshape(n, c, hw)                 # free reshape, NCHW-native
    itemsize = x_nchw.dtype.itemsize
    c_pad = _sublane_pad(c, itemsize)
    hw_pad = _round_up(hw, 128)

    gba = jnp.stack([gamma.astype(jnp.float32),
                     beta.astype(jnp.float32),
                     alpha.astype(jnp.float32)], axis=0).reshape(3, c, 1)

    padded_bytes = n * c_pad * hw_pad * itemsize
    f32_bytes = n * c_pad * hw_pad * 4
    fits_vmem = (4 * padded_bytes + 2 * f32_bytes) <= _FUSED_VMEM_BUDGET

    if fits_vmem and not force_two_pass:
        # ---- single fused pass: 2x HBM traffic instead of 3x ----------------
        out3 = pl.pallas_call(
            _fused_kernel,
            grid=(1,),
            in_specs=[pl.BlockSpec((n, c, hw), lambda i: (0, 0, 0)),
                      pl.BlockSpec((3, c, 1), lambda i: (0, 0, 0))],
            out_specs=pl.BlockSpec((n, c, hw), lambda i: (0, 0, 0)),
            out_shape=jax.ShapeDtypeStruct((n, c, hw), x_nchw.dtype),
            compiler_params=pltpu.CompilerParams(
                dimension_semantics=("arbitrary",),
                vmem_limit_bytes=_VMEM_LIMIT),
        )(x3, gba)
        return out3.reshape(n, c, h, w)

    # ---- pass 1: per-batch partial sum / sum-of-squares ---------------------
    t_stats = _pick_hw_tile(hw, c_pad, itemsize, stats_block_bytes)
    stats_grid = (n, pl.cdiv(hw, t_stats))
    sum_x, sum_xx = pl.pallas_call(
        _make_stats_kernel(t_stats, hw, hw % t_stats != 0),
        grid=stats_grid,
        in_specs=[pl.BlockSpec((1, c, t_stats), lambda i, j: (i, 0, j))],
        out_specs=[pl.BlockSpec((1, c, 1), lambda i, j: (i, 0, 0)),
                   pl.BlockSpec((1, c, 1), lambda i, j: (i, 0, 0))],
        out_shape=[jax.ShapeDtypeStruct((n, c, 1), jnp.float32),
                   jax.ShapeDtypeStruct((n, c, 1), jnp.float32)],
        compiler_params=pltpu.CompilerParams(
            # batch axis is parallel (per-batch partials), hw axis accumulates
            dimension_semantics=("parallel", "arbitrary"),
            vmem_limit_bytes=_VMEM_LIMIT),
    )(x3)

    # ---- pass 2: streaming BN-fold + normalize + PReLU ----------------------
    t_apply = _pick_hw_tile(hw, c_pad, itemsize, apply_block_bytes)
    apply_grid = (n, pl.cdiv(hw, t_apply))
    out3 = pl.pallas_call(
        _make_apply_kernel(1.0 / float(n * hw)),
        grid=apply_grid,
        in_specs=[pl.BlockSpec((1, c, t_apply), lambda i, j: (i, 0, j)),
                  pl.BlockSpec((n, c, 1), lambda i, j: (0, 0, 0)),
                  pl.BlockSpec((n, c, 1), lambda i, j: (0, 0, 0)),
                  pl.BlockSpec((3, c, 1), lambda i, j: (0, 0, 0))],
        out_specs=pl.BlockSpec((1, c, t_apply), lambda i, j: (i, 0, j)),
        out_shape=jax.ShapeDtypeStruct((n, c, hw), x_nchw.dtype),
        compiler_params=pltpu.CompilerParams(
            dimension_semantics=("parallel", "parallel"),
            vmem_limit_bytes=_VMEM_LIMIT),
    )(x3, sum_x, sum_xx, gba)
    return out3.reshape(n, c, h, w)


# --------------------------------- reference --------------------------------

def _reference(x_nchw, gamma, beta, alpha):
    mean = jnp.mean(x_nchw, axis=(0, 2, 3), keepdims=True)
    var = jnp.mean((x_nchw - mean) ** 2, axis=(0, 2, 3), keepdims=True)
    y = (x_nchw - mean) / jnp.sqrt(var + EPS)
    y = y * gamma.reshape(1, -1, 1, 1) + beta.reshape(1, -1, 1, 1)
    a = alpha.reshape(1, -1, 1, 1)
    return jnp.where(y >= 0.0, y, a * y)


if __name__ == "__main__":
    key = jax.random.PRNGKey(0)
    kx, kg, kb, kx2 = jax.random.split(key, 4)

    fn = jax.jit(bnprelu, static_argnames=(
        "force_two_pass", "stats_block_bytes", "apply_block_bytes"))

    # ---- test 1: small shape, fused single-pass path ------------------------
    N, C, H, W = 2, 4, 16, 16
    x = jax.random.normal(kx, (N, C, H, W), dtype=jnp.float32)
    gamma = 1.0 + 0.1 * jax.random.normal(kg, (C,), dtype=jnp.float32)  # BN weight
    beta = 0.1 * jax.random.normal(kb, (C,), dtype=jnp.float32)         # BN bias
    alpha = jnp.full((C,), 0.25, dtype=jnp.float32)                     # PReLU default

    out = fn(x, gamma, beta, alpha)
    jax.block_until_ready(out)
    ref = _reference(x, gamma, beta, alpha)
    assert out.shape == (N, C, H, W)
    assert jnp.allclose(out, ref, atol=1e-4, rtol=1e-4)

    # ---- test 2: same input, force the two-pass streaming path --------------
    out2 = fn(x, gamma, beta, alpha, force_two_pass=True)
    jax.block_until_ready(out2)
    assert jnp.allclose(out2, ref, atol=1e-4, rtol=1e-4)

    # ---- test 3: hw not a multiple of 128 + tiny tiles -> tail-mask path ----
    H3, W3 = 10, 30                                  # hw = 300 (tail of 44 lanes)
    x3 = jax.random.normal(kx2, (N, C, H3, W3), dtype=jnp.float32)
    out3 = fn(x3, gamma, beta, alpha, force_two_pass=True,
              stats_block_bytes=4096, apply_block_bytes=4096)
    jax.block_until_ready(out3)
    ref3 = _reference(x3, gamma, beta, alpha)
    assert out3.shape == (N, C, H3, W3)
    assert jnp.allclose(out3, ref3, atol=1e-4, rtol=1e-4)

    print("KERNEL_OK")
</pallas_src>

<mosaic_0001>
module attributes {stable_mosaic.version = 11 : i64} {
  func.func @_fused_kernel(%arg0: i32, %arg1: memref<2x4x256xf32, #tpu.memory_space<vmem>>, %arg2: memref<3x4x1xf32, #tpu.memory_space<vmem>>, %arg3: memref<2x4x256xf32, #tpu.memory_space<vmem>>) attributes {dimension_semantics = [#tpu.dimension_semantics<arbitrary>], iteration_bounds = array<i64: 1>, scalar_prefetch = 0 : i64, scratch_operands = 0 : i64, tpu.core_type = #tpu.core_type<tc>, window_params = [{pipeline_mode = #tpu.pipeline_mode<synchronous>, transform_indices = @transform_0, window_bounds = array<i64: 2, 4, 256>}, {pipeline_mode = #tpu.pipeline_mode<synchronous>, transform_indices = @transform_1, window_bounds = array<i64: 3, 4, 1>}, {pipeline_mode = #tpu.pipeline_mode<synchronous>, transform_indices = @transform_2, window_bounds = array<i64: 2, 4, 256>}]} {
    %c0 = arith.constant 0 : index
    %c0_0 = arith.constant 0 : index
    %c0_1 = arith.constant 0 : index
    %0 = vector.load %arg1[%c0, %c0_0, %c0_1] : memref<2x4x256xf32, #tpu.memory_space<vmem>>, vector<2x4x256xf32>
    %cst = arith.constant dense<0.000000e+00> : vector<2x4xf32>
    %1 = vector.multi_reduction <add>, %0, %cst [2] : vector<2x4x256xf32> to vector<2x4xf32>
    %2 = vector.shape_cast %1 : vector<2x4xf32> to vector<2x4x1xf32>
    %cst_2 = arith.constant dense<0.000000e+00> : vector<4x1xf32>
    %3 = vector.multi_reduction <add>, %2, %cst_2 [0] : vector<2x4x1xf32> to vector<4x1xf32>
    %4 = vector.shape_cast %3 : vector<4x1xf32> to vector<1x4x1xf32>
    %cst_3 = arith.constant 0.001953125 : f32
    %5 = vector.broadcast %cst_3 : f32 to vector<1x4x1xf32>
    %6 = arith.mulf %4, %5 : vector<1x4x1xf32>
    %7 = vector.broadcast %6 : vector<1x4x1xf32> to vector<2x4x256xf32>
    %8 = arith.subf %0, %7 : vector<2x4x256xf32>
    %9 = arith.mulf %8, %8 : vector<2x4x256xf32>
    %cst_4 = arith.constant dense<0.000000e+00> : vector<2x4xf32>
    %10 = vector.multi_reduction <add>, %9, %cst_4 [2] : vector<2x4x256xf32> to vector<2x4xf32>
    %11 = vector.shape_cast %10 : vector<2x4xf32> to vector<2x4x1xf32>
    %cst_5 = arith.constant dense<0.000000e+00> : vector<4x1xf32>
    %12 = vector.multi_reduction <add>, %11, %cst_5 [0] : vector<2x4x1xf32> to vector<4x1xf32>
    %13 = vector.shape_cast %12 : vector<4x1xf32> to vector<1x4x1xf32>
    %cst_6 = arith.constant 0.001953125 : f32
    %14 = vector.broadcast %cst_6 : f32 to vector<1x4x1xf32>
    %15 = arith.mulf %13, %14 : vector<1x4x1xf32>
    %cst_7 = arith.constant 1.000000e-03 : f32
    %16 = vector.broadcast %cst_7 : f32 to vector<1x4x1xf32>
    %17 = arith.addf %15, %16 : vector<1x4x1xf32>
    %18 = math.rsqrt %17 : vector<1x4x1xf32>
    %c0_8 = arith.constant 0 : index
    %c0_9 = arith.constant 0 : index
    %c0_10 = arith.constant 0 : index
    %19 = vector.load %arg2[%c0_8, %c0_9, %c0_10] : memref<3x4x1xf32, #tpu.memory_space<vmem>>, vector<1x4x1xf32>
    %20 = vector.shape_cast %19 : vector<1x4x1xf32> to vector<4x1xf32>
    %21 = vector.shape_cast %20 : vector<4x1xf32> to vector<1x4x1xf32>
    %22 = arith.mulf %21, %18 : vector<1x4x1xf32>
    %c1 = arith.constant 1 : index
    %c0_11 = arith.constant 0 : index
    %c0_12 = arith.constant 0 : index
    %23 = vector.load %arg2[%c1, %c0_11, %c0_12] : memref<3x4x1xf32, #tpu.memory_space<vmem>>, vector<1x4x1xf32>
    %24 = vector.shape_cast %23 : vector<1x4x1xf32> to vector<4x1xf32>
    %25 = arith.mulf %6, %22 : vector<1x4x1xf32>
    %26 = vector.shape_cast %24 : vector<4x1xf32> to vector<1x4x1xf32>
    %27 = arith.subf %26, %25 : vector<1x4x1xf32>
    %c2 = arith.constant 2 : index
    %c0_13 = arith.constant 0 : index
    %c0_14 = arith.constant 0 : index
    %28 = vector.load %arg2[%c2, %c0_13, %c0_14] : memref<3x4x1xf32, #tpu.memory_space<vmem>>, vector<1x4x1xf32>
    %29 = vector.shape_cast %28 : vector<1x4x1xf32> to vector<4x1xf32>
    %30 = vector.broadcast %22 : vector<1x4x1xf32> to vector<2x4x256xf32>
    %31 = arith.mulf %0, %30 : vector<2x4x256xf32>
    %32 = vector.broadcast %27 : vector<1x4x1xf32> to vector<2x4x256xf32>
    %33 = arith.addf %31, %32 : vector<2x4x256xf32>
    %cst_15 = arith.constant 0.000000e+00 : f32
    %34 = vector.broadcast %cst_15 : f32 to vector<2x4x256xf32>
    %35 = arith.cmpf oge, %33, %34 : vector<2x4x256xf32>
    %36 = vector.shape_cast %29 : vector<4x1xf32> to vector<1x4x1xf32>
    %37 = vector.broadcast %36 : vector<1x4x1xf32> to vector<2x4x256xf32>
    %38 = arith.mulf %37, %33 : vector<2x4x256xf32>
    %39 = arith.select %35, %33, %38 : vector<2x4x256xi1>, vector<2x4x256xf32>
    %c0_16 = arith.constant 0 : index
    %c0_17 = arith.constant 0 : index
    %c0_18 = arith.constant 0 : index
    %40 = vector.load %arg3[%c0_16, %c0_17, %c0_18] : memref<2x4x256xf32, #tpu.memory_space<vmem>>, vector<2x4x256xf32>
    tpu.vector_store %arg3[%c0_16, %c0_17, %c0_18], %39 {strides = array<i32>} : memref<2x4x256xf32, #tpu.memory_space<vmem>>, vector<2x4x256xf32>,
    return
  }
  func.func @transform_0(%arg0: i32) -> (i32, i32, i32) {
    %c0_i32 = arith.constant 0 : i32
    %c0_i32_0 = arith.constant 0 : i32
    %c0_i32_1 = arith.constant 0 : i32
    %c0_i32_2 = arith.constant 0 : i32
    return %c0_i32, %c0_i32_0, %c0_i32_1 : i32, i32, i32
  }
  func.func @transform_1(%arg0: i32) -> (i32, i32, i32) {
    %c0_i32 = arith.constant 0 : i32
    %c0_i32_0 = arith.constant 0 : i32
    %c0_i32_1 = arith.constant 0 : i32
    %c0_i32_2 = arith.constant 0 : i32
    return %c0_i32, %c0_i32_0, %c0_i32_1 : i32, i32, i32
  }
  func.func @transform_2(%arg0: i32) -> (i32, i32, i32) {
    %c0_i32 = arith.constant 0 : i32
    %c0_i32_0 = arith.constant 0 : i32
    %c0_i32_1 = arith.constant 0 : i32
    %c0_i32_2 = arith.constant 0 : i32
    return %c0_i32, %c0_i32_0, %c0_i32_1 : i32, i32, i32
  }
}

</mosaic_0001>

<llo_original>
// kernel: bnprelu.1
$region0: #{bnprelu.1}
  #allocation0 [shape = 'u32[]', space=smem, size = 0x4, offset = 0x4, fixed_abs, tag = 'smem constant byte address 0x4 - core index']
  #allocation1 [shape = 'u32[144,128]{1,0:T(1,128)}', space=vmem, size = 0x12000, scoped, tag = 'internal scratch']
  %s0 = inlined_call_operand.vmem [shape: f32[2,4,256], index: 0, kind: input, shape index: {}]
  %s1 = inlined_call_operand.vmem [shape: f32[3,4,1], index: 1, kind: input, shape index: {}]
  %s2 = inlined_call_operand.vmem [shape: f32[2,4,256], index: 2, kind: output, shape index: {}]
  %s3 = sld [smem:[#allocation0]]
  $region18: #{bnprelu.1} parent=0
    _
  %s5 = ssub.s32 1, %s3
  %s6 = scalar_select 0, %s5, %s3
  // Predicated region
  $region2: #{bnprelu.1} parent=0 // pred_check
    _
  $region3: #{bnprelu.1} parent=0 // pred_check_branch
    %8 = sbr.rel (0) target = $region5
  $region4: #{bnprelu.1} parent=0 // pred_region
    _
  $region5: #{bnprelu.1} parent=0 // pred_fallthru
    _
  // Predicated region
  $region6: #{bnprelu.1} parent=0 // pred_check
    _
  $region7: #{bnprelu.1} parent=0 // pred_check_branch
    %10 = sbr.rel (0) target = $region9
  $region8: #{bnprelu.1} parent=0 // pred_region
    _
  $region9: #{bnprelu.1} parent=0 // pred_fallthru
    _
  %v11 = vld [vmem:[%s0] sm:$0xff]
  %v12 = vld [vmem:[%s0 + $0x8] sm:$0xff]
  %v15 = vcombine.high %v11, %v11
  %v16 = vcombine.high %v12, %v12
  %vm19 = vcmask 1043456
  %v20 = vsel %vm19, %v11, 0.0
  %v21 = vsel %vm19, %v15, 0.0
  %v22 = vadd.f32 %v20, %v21
  %23 = vadd.xlane.f32.xlu0 %v22
  %v24 = vpop.xlane.xlu0 %23
  %v25 = vsel %vm19, %v12, 0.0
  %v26 = vsel %vm19, %v16, 0.0
  %v27 = vadd.f32 %v25, %v26
  %28 = vadd.xlane.f32.xlu0 %v27
  %v29 = vpop.xlane.xlu0 %28
  %v30 = vsel %vm19, %v24, 0.0
  %v31 = vsel %vm19, %v29, 0.0
  %v32 = vadd.f32 %v30, %v31
  %v33 = vmul.f32 %v32, 0.001953125
  %v36 = vunpack.c.l.s4 839922192
  %v37 = vunpack.c.0.s8 %v36
  %v38 = vlaneseq
  %v39 = vshrl.u32 %v38, 7
  %v40 = vsub.s32 %v37, %v39
  %v41 = vrot.slane %v33, %v40
  %v43 = vsub.f32 %v11, %v41
  %v44 = vsub.f32 %v12, %v41
  %v45 = vmul.f32 %v43, %v43
  %v46 = vmul.f32 %v44, %v44
  %v49 = vcombine.high %v45, %v45
  %v50 = vcombine.high %v46, %v46
  %v53 = vsel %vm19, %v45, 0.0
  %v54 = vsel %vm19, %v49, 0.0
  %v55 = vadd.f32 %v53, %v54
  %56 = vadd.xlane.f32.xlu0 %v55
  %v57 = vpop.xlane.xlu0 %56
  %v58 = vsel %vm19, %v46, 0.0
  %v59 = vsel %vm19, %v50, 0.0
  %v60 = vadd.f32 %v58, %v59
  %61 = vadd.xlane.f32.xlu0 %v60
  %v62 = vpop.xlane.xlu0 %61
  %v63 = vsel %vm19, %v57, 0.0
  %v64 = vsel %vm19, %v62, 0.0
  %v65 = vadd.f32 %v63, %v64
  %v66 = vmul.f32 %v65, 0.001953125
  %v67 = vadd.f32 %v66, 0.001
  %v68 = vrsqrt.pop %v67
  %v69 = vld [vmem:[%s1] sm:$0xf]
  %v70 = vmul.f32 %v69, %v68
  %s71 = scalar_lea.vmem %s1, 4
  %v72 = vld [vmem:[%s71] sm:$0xf]
  %v73 = vmul.f32 %v33, %v70
  %v74 = vsub.f32 %v72, %v73
  %s75 = scalar_lea.vmem %s1, 8
  %v76 = vld [vmem:[%s75] sm:$0xf]
  %78 = vset.pattern.permute.xlu0 0
  %79 = vperm.xlu0 %78, %v70
  %v80 = vpop.permute.xlu0 %79
  %v82 = vunpack.c.l.s4 839922192
  %v83 = vunpack.c.0.s8 %v82
  %v84 = vlaneseq
  %v85 = vshrl.u32 %v84, 7
  %v86 = vsub.s32 %v83, %v85
  %v87 = vrot.slane %v80, %v86
  %v89 = vmul.f32 %v11, %v87
  %v90 = vmul.f32 %v12, %v87
  %92 = vset.pattern.permute.xlu0 0
  %93 = vperm.xlu0 %92, %v74
  %v94 = vpop.permute.xlu0 %93
  %v96 = vunpack.c.l.s4 839922192
  %v97 = vunpack.c.0.s8 %v96
  %v98 = vlaneseq
  %v99 = vshrl.u32 %v98, 7
  %v100 = vsub.s32 %v97, %v99
  %v101 = vrot.slane %v94, %v100
  %v103 = vadd.f32 %v89, %v101
  %v104 = vadd.f32 %v90, %v101
  %vm105 = vcmp.ge.f32.partialorder %v103, 0.0
  %vm106 = vcmp.ge.f32.partialorder %v104, 0.0
  %108 = vset.pattern.permute.xlu0 0
  %109 = vperm.xlu0 %108, %v76
  %v110 = vpop.permute.xlu0 %109
  %v114 = vcombine.high %v103, %v103
  %v115 = vcombine.high %v104, %v104
  %v118 = vmul.f32 %v110, %v103
  %v119 = vmul.f32 %v110, %v114
  %v120 = vmul.f32 %v110, %v104
  %v121 = vmul.f32 %v110, %v115
  %v126 = vcombine.low %v118, %v119
  %v127 = vcombine.low %v120, %v121
  %v130 = vsel %vm105, %v103, %v126
  %v131 = vsel %vm106, %v104, %v127
  %132 = vst [vmem:[%s2] sm:$0xff] %v130
  %133 = vst [vmem:[%s2 + $0x8] sm:$0xff] %v131
  // Predicated region
  $region10: #{bnprelu.1} parent=0 // pred_check
    _
  $region11: #{bnprelu.1} parent=0 // pred_check_branch
    %135 = sbr.rel (0) target = $region13
  $region12: #{bnprelu.1} parent=0 // pred_region
    _
  $region13: #{bnprelu.1} parent=0 // pred_fallthru
    _
  // Predicated region
  $region14: #{bnprelu.1} parent=0 // pred_check
    _
  $region15: #{bnprelu.1} parent=0 // pred_check_branch
    %137 = sbr.rel (0) target = $region17
  $region16: #{bnprelu.1} parent=0 // pred_region
    _
  $region17: #{bnprelu.1} parent=0 // pred_fallthru
    _

</llo_original>
